<compile_context>
chip_gen: v6e
topology: v6e:2x2x1
jax: 0.10.0
libtpu: 0.0.40
codegen_flags: <defaults>
</compile_context>

<pallas_src>
import jax
import jax.numpy as jnp
from jax.experimental import pallas as pl
from jax.experimental.pallas import tpu as pltpu

LEAKY_SLOPE = 0.01  # nn.LeakyReLU default negative_slope


def _leaky_relu(x):
    return jnp.where(x > 0, x, LEAKY_SLOPE * x)


def _round_up(n, m):
    return (n + m - 1) // m * m


def reslinear_kernel(x_ref, w0_ref, w1_ref, vec_ref, o_ref):
    # vec rows: 0=b0, 1=bn1_scale, 2=bn1_shift, 3=folded_shift2, 4=bn3_scale,
    #           5=bn3_shift, 6..7=padding
    vec = vec_ref[...]                        # (8, dout_p) f32
    b0 = vec[0:1, :]
    s1 = vec[1:2, :]
    t1 = vec[2:3, :]
    shift2 = vec[3:4, :]
    s3 = vec[4:5, :]
    t3 = vec[5:6, :]

    # Cast x to bf16 in-kernel (input stays f32 in HBM; no host pad/cast pass).
    x = x_ref[...].astype(w0_ref.dtype)       # (tb, din) bf16

    # first_linear (bf16 MXU inputs, f32 accumulation)
    x1 = jnp.dot(x, w0_ref[...], preferred_element_type=jnp.float32) + b0
    # sequential: BN1 -> LeakyReLU -> Linear(+folded BN2 & bias) -> LeakyReLU
    h = _leaky_relu(x1 * s1 + t1)
    h = jnp.dot(h.astype(w1_ref.dtype), w1_ref[...],
                preferred_element_type=jnp.float32) + shift2
    h = _leaky_relu(h)
    # residual add + output_seq: BN3
    x2 = h + x1
    y = x2 * s3 + t3                           # (tb, dout_p) f32
    # Narrow store: only the real dout lanes are written to HBM.
    o_ref[...] = y[:, : o_ref.shape[1]].astype(o_ref.dtype)


def prepare_params(p, matmul_dtype=jnp.bfloat16):
    """Fold BN2/bias, pad feature (out) dim to 128 lanes, cast matmul weights."""
    din, dout = p["w0"].shape
    dout_p = _round_up(dout, 128)

    # w0 stays (din, dout_p): din is the full array dim so no lane padding of K.
    w0 = jnp.zeros((din, dout_p), jnp.float32).at[:, :dout].set(p["w0"])

    # Fold BN2 into the second linear:
    # (h@w1 + b1)*s2 + t2 == h@(w1*s2) + (b1*s2 + t2)
    w1_folded = p["w1"] * p["bn2_scale"]                       # column scale
    shift2 = p["b1"] * p["bn2_scale"] + p["bn2_shift"]
    w1 = jnp.zeros((dout_p, dout_p), jnp.float32).at[:dout, :dout].set(w1_folded)

    def pad_vec(v):
        return jnp.zeros((1, dout_p), jnp.float32).at[:, :dout].set(
            v.reshape(1, -1).astype(jnp.float32))

    vec = jnp.concatenate([
        pad_vec(p["b0"]),
        pad_vec(p["bn1_scale"]), pad_vec(p["bn1_shift"]),
        pad_vec(shift2),
        pad_vec(p["bn3_scale"]), pad_vec(p["bn3_shift"]),
        jnp.zeros((2, dout_p), jnp.float32),                   # pad to 8 sublanes
    ], axis=0)

    return dict(w0=w0.astype(matmul_dtype), w1=w1.astype(matmul_dtype),
                vec=vec, din=din, dout=dout, dout_p=dout_p)


def _vmem_budget(tb, din, dout, dout_p):
    """Right-sized VMEM limit (bytes): double-buffered I/O tiles + resident
    weights + in-flight f32 intermediates, with headroom.  Stays well under
    v7x's 64 MiB / TensorCore."""
    io_bytes = 2 * tb * (din + dout) * 4                 # x + out tiles, dbl-buf
    w_bytes = 2 * ((din + dout_p) * dout_p * 2 + 8 * dout_p * 4)
    live_bytes = 6 * tb * dout_p * 4                     # x1, h, temporaries
    total = io_bytes + w_bytes + live_bytes + (2 << 20)
    return int(min(48 << 20, max(16 << 20, _round_up(total, 1 << 20))))


def res_linear_net(x, prep, *, block_b=2048, min_grid_steps=2):
    """x: (B, num_in_feats) f32.  prep: output of prepare_params()."""
    B, din = x.shape
    assert din == prep["din"]
    dout, dout_p = prep["dout"], prep["dout_p"]

    # Grid sizing: tb ~ B / num_steps (<= 7 wasted rows on the last block).
    num_steps = pl.cdiv(B, block_b)
    # >= 2 "parallel" grid steps lets v7x megacore shard the batch over its
    # 2 TensorCores (no cost on v5e/v6e); only force it when B is big enough.
    if num_steps < min_grid_steps and B >= 8 * min_grid_steps:
        num_steps = min_grid_steps
    tb = _round_up(pl.cdiv(B, num_steps), 8)
    grid = pl.cdiv(B, tb)          # partial last block: OOB rows are dropped

    out = pl.pallas_call(
        reslinear_kernel,
        out_shape=jax.ShapeDtypeStruct((B, dout), jnp.float32),
        grid=(grid,),
        in_specs=[
            pl.BlockSpec((tb, din), lambda i: (i, 0)),          # x tile (f32)
            pl.BlockSpec((din, dout_p), lambda i: (0, 0)),      # w0 (resident)
            pl.BlockSpec((dout_p, dout_p), lambda i: (0, 0)),   # w1 (resident)
            pl.BlockSpec((8, dout_p), lambda i: (0, 0)),        # packed vectors
        ],
        out_specs=pl.BlockSpec((tb, dout), lambda i: (i, 0)),   # narrow store
        compiler_params=pltpu.CompilerParams(
            dimension_semantics=("parallel",),
            vmem_limit_bytes=_vmem_budget(tb, din, dout, dout_p),
        ),
    )(x.astype(jnp.float32), prep["w0"], prep["w1"], prep["vec"])
    return out


def init_params(num_in_feats, num_out_feats, key):
    """Deterministic synthetic parameters matching the module's shapes (f32)."""
    ks = jax.random.split(key, 16)
    eps = 1e-5

    def bn_fold(k):
        kg, kb, km, kv = jax.random.split(k, 4)
        gamma = 1.0 + 0.05 * jax.random.normal(kg, (num_out_feats,), jnp.float32)
        beta = 0.05 * jax.random.normal(kb, (num_out_feats,), jnp.float32)
        rmean = 0.1 * jax.random.normal(km, (num_out_feats,), jnp.float32)
        rvar = 1.0 + 0.1 * jax.random.uniform(kv, (num_out_feats,), jnp.float32)
        scale = gamma / jnp.sqrt(rvar + eps)
        shift = beta - rmean * scale
        return scale.reshape(1, -1), shift.reshape(1, -1)

    # Linear weights stored as (in, out) == PyTorch weight.T
    w0 = jax.random.normal(ks[0], (num_in_feats, num_out_feats), jnp.float32) * 0.1
    b0 = (0.01 * jax.random.normal(ks[1], (num_out_feats,), jnp.float32)).reshape(1, -1)
    w1 = jax.random.normal(ks[2], (num_out_feats, num_out_feats), jnp.float32) * 0.1
    b1 = (0.01 * jax.random.normal(ks[3], (num_out_feats,), jnp.float32)).reshape(1, -1)

    bn1_scale, bn1_shift = bn_fold(ks[4])
    bn2_scale, bn2_shift = bn_fold(ks[5])
    bn3_scale, bn3_shift = bn_fold(ks[6])

    return dict(w0=w0, b0=b0, w1=w1, b1=b1,
                bn1_scale=bn1_scale, bn1_shift=bn1_shift,
                bn2_scale=bn2_scale, bn2_shift=bn2_shift,
                bn3_scale=bn3_scale, bn3_shift=bn3_shift)


def _reference(x, p):
    """Pure-JAX f32 reference of the same forward (eval-mode BN)."""
    x1 = x @ p["w0"] + p["b0"]
    h = _leaky_relu(x1 * p["bn1_scale"] + p["bn1_shift"])
    h = h @ p["w1"] + p["b1"]
    h = _leaky_relu(h * p["bn2_scale"] + p["bn2_shift"])
    x2 = h + x1
    return x2 * p["bn3_scale"] + p["bn3_shift"]


if __name__ == "__main__":
    key = jax.random.PRNGKey(0)
    k_x, k_p, k_x2 = jax.random.split(key, 3)

    batch, num_in_feats, num_out_feats = 8, 32, 64
    x = jax.random.normal(k_x, (batch, num_in_feats), jnp.float32)
    raw = init_params(num_in_feats, num_out_feats, k_p)
    prep = prepare_params(raw)

    # single-tile path
    out = jax.block_until_ready(res_linear_net(x, prep))
    ref = _reference(x, raw)
    assert out.shape == (batch, num_out_feats)
    assert jnp.allclose(out, ref, atol=3e-2, rtol=3e-2), \
        float(jnp.max(jnp.abs(out - ref)))

    # multi-step grid path (partial last block + >=2 grid steps exercised)
    batch2 = 300
    x2 = jax.random.normal(k_x2, (batch2, num_in_feats), jnp.float32)
    out2 = jax.block_until_ready(res_linear_net(x2, prep, block_b=128))
    ref2 = _reference(x2, raw)
    assert out2.shape == (batch2, num_out_feats)
    assert jnp.allclose(out2, ref2, atol=3e-2, rtol=3e-2), \
        float(jnp.max(jnp.abs(out2 - ref2)))

    print("KERNEL_OK")
</pallas_src>

<mosaic_0001>
module attributes {stable_mosaic.version = 11 : i64} {
  func.func @reslinear_kernel(%arg0: i32, %arg1: memref<8x32xf32, #tpu.memory_space<vmem>>, %arg2: memref<32x128xbf16, #tpu.memory_space<vmem>>, %arg3: memref<128x128xbf16, #tpu.memory_space<vmem>>, %arg4: memref<8x128xf32, #tpu.memory_space<vmem>>, %arg5: memref<8x64xf32, #tpu.memory_space<vmem>>) attributes {dimension_semantics = [#tpu.dimension_semantics<parallel>], iteration_bounds = array<i64: 1>, scalar_prefetch = 0 : i64, scratch_operands = 0 : i64, tpu.core_type = #tpu.core_type<tc>, window_params = [{transform_indices = @transform_0, window_bounds = array<i64: 8, 32>}, {pipeline_mode = #tpu.pipeline_mode<synchronous>, transform_indices = @transform_1, window_bounds = array<i64: 32, 128>}, {pipeline_mode = #tpu.pipeline_mode<synchronous>, transform_indices = @transform_2, window_bounds = array<i64: 128, 128>}, {pipeline_mode = #tpu.pipeline_mode<synchronous>, transform_indices = @transform_3, window_bounds = array<i64: 8, 128>}, {transform_indices = @transform_4, window_bounds = array<i64: 8, 64>}]} {
    %c0 = arith.constant 0 : index
    %c0_0 = arith.constant 0 : index
    %0 = vector.load %arg4[%c0, %c0_0] : memref<8x128xf32, #tpu.memory_space<vmem>>, vector<8x128xf32>
    %1 = vector.extract_strided_slice %0 {offsets = [0, 0], sizes = [1, 128], strides = [1, 1]} : vector<8x128xf32> to vector<1x128xf32>
    %2 = vector.extract_strided_slice %0 {offsets = [1, 0], sizes = [1, 128], strides = [1, 1]} : vector<8x128xf32> to vector<1x128xf32>
    %3 = vector.extract_strided_slice %0 {offsets = [2, 0], sizes = [1, 128], strides = [1, 1]} : vector<8x128xf32> to vector<1x128xf32>
    %4 = vector.extract_strided_slice %0 {offsets = [3, 0], sizes = [1, 128], strides = [1, 1]} : vector<8x128xf32> to vector<1x128xf32>
    %5 = vector.extract_strided_slice %0 {offsets = [4, 0], sizes = [1, 128], strides = [1, 1]} : vector<8x128xf32> to vector<1x128xf32>
    %6 = vector.extract_strided_slice %0 {offsets = [5, 0], sizes = [1, 128], strides = [1, 1]} : vector<8x128xf32> to vector<1x128xf32>
    %c0_1 = arith.constant 0 : index
    %c0_2 = arith.constant 0 : index
    %7 = vector.load %arg1[%c0_1, %c0_2] : memref<8x32xf32, #tpu.memory_space<vmem>>, vector<8x32xf32>
    %8 = arith.truncf %7 : vector<8x32xf32> to vector<8x32xbf16>
    %c0_3 = arith.constant 0 : index
    %c0_4 = arith.constant 0 : index
    %9 = vector.load %arg2[%c0_3, %c0_4] : memref<32x128xbf16, #tpu.memory_space<vmem>>, vector<32x128xbf16>
    %cst = arith.constant dense<0.000000e+00> : vector<8x128xf32>
    %10 = tpu.matmul %8, %9, %cst {dimension_numbers = #tpu.dot_dimension_numbers<[1], [0], [0], [1], [0, 0, 1, 1], [], []>} : vector<8x32xbf16>, vector<32x128xbf16>, vector<8x128xf32> -> vector<8x128xf32>
    %11 = vector.broadcast %1 : vector<1x128xf32> to vector<8x128xf32>
    %12 = arith.addf %10, %11 : vector<8x128xf32>
    %13 = vector.broadcast %2 : vector<1x128xf32> to vector<8x128xf32>
    %14 = arith.mulf %12, %13 : vector<8x128xf32>
    %15 = vector.broadcast %3 : vector<1x128xf32> to vector<8x128xf32>
    %16 = arith.addf %14, %15 : vector<8x128xf32>
    %cst_5 = arith.constant 0.000000e+00 : f32
    %17 = vector.broadcast %cst_5 : f32 to vector<8x128xf32>
    %18 = arith.cmpf ogt, %16, %17 : vector<8x128xf32>
    %cst_6 = arith.constant 0.00999999977 : f32
    %19 = vector.broadcast %cst_6 : f32 to vector<8x128xf32>
    %20 = arith.mulf %19, %16 : vector<8x128xf32>
    %21 = arith.select %18, %16, %20 : vector<8x128xi1>, vector<8x128xf32>
    %22 = arith.truncf %21 : vector<8x128xf32> to vector<8x128xbf16>
    %c0_7 = arith.constant 0 : index
    %c0_8 = arith.constant 0 : index
    %23 = vector.load %arg3[%c0_7, %c0_8] : memref<128x128xbf16, #tpu.memory_space<vmem>>, vector<128x128xbf16>
    %cst_9 = arith.constant dense<0.000000e+00> : vector<8x128xf32>
    %24 = tpu.matmul %22, %23, %cst_9 {dimension_numbers = #tpu.dot_dimension_numbers<[1], [0], [0], [1], [0, 0, 1, 1], [], []>} : vector<8x128xbf16>, vector<128x128xbf16>, vector<8x128xf32> -> vector<8x128xf32>
    %25 = vector.broadcast %4 : vector<1x128xf32> to vector<8x128xf32>
    %26 = arith.addf %24, %25 : vector<8x128xf32>
    %cst_10 = arith.constant 0.000000e+00 : f32
    %27 = vector.broadcast %cst_10 : f32 to vector<8x128xf32>
    %28 = arith.cmpf ogt, %26, %27 : vector<8x128xf32>
    %cst_11 = arith.constant 0.00999999977 : f32
    %29 = vector.broadcast %cst_11 : f32 to vector<8x128xf32>
    %30 = arith.mulf %29, %26 : vector<8x128xf32>
    %31 = arith.select %28, %26, %30 : vector<8x128xi1>, vector<8x128xf32>
    %32 = arith.addf %31, %12 : vector<8x128xf32>
    %33 = vector.broadcast %5 : vector<1x128xf32> to vector<8x128xf32>
    %34 = arith.mulf %32, %33 : vector<8x128xf32>
    %35 = vector.broadcast %6 : vector<1x128xf32> to vector<8x128xf32>
    %36 = arith.addf %34, %35 : vector<8x128xf32>
    %37 = vector.extract_strided_slice %36 {offsets = [0, 0], sizes = [8, 64], strides = [1, 1]} : vector<8x128xf32> to vector<8x64xf32>
    %c0_12 = arith.constant 0 : index
    %c0_13 = arith.constant 0 : index
    %38 = vector.load %arg5[%c0_12, %c0_13] : memref<8x64xf32, #tpu.memory_space<vmem>>, vector<8x64xf32>
    tpu.vector_store %arg5[%c0_12, %c0_13], %37 {strides = array<i32>} : memref<8x64xf32, #tpu.memory_space<vmem>>, vector<8x64xf32>,
    return
  }
  func.func @transform_0(%arg0: i32) -> (i32, i32) {
    %c0_i32 = arith.constant 0 : i32
    %c0_i32_0 = arith.constant 0 : i32
    return %arg0, %c0_i32 : i32, i32
  }
  func.func @transform_1(%arg0: i32) -> (i32, i32) {
    %c0_i32 = arith.constant 0 : i32
    %c0_i32_0 = arith.constant 0 : i32
    %c0_i32_1 = arith.constant 0 : i32
    return %c0_i32, %c0_i32_0 : i32, i32
  }
  func.func @transform_2(%arg0: i32) -> (i32, i32) {
    %c0_i32 = arith.constant 0 : i32
    %c0_i32_0 = arith.constant 0 : i32
    %c0_i32_1 = arith.constant 0 : i32
    return %c0_i32, %c0_i32_0 : i32, i32
  }
  func.func @transform_3(%arg0: i32) -> (i32, i32) {
    %c0_i32 = arith.constant 0 : i32
    %c0_i32_0 = arith.constant 0 : i32
    %c0_i32_1 = arith.constant 0 : i32
    return %c0_i32, %c0_i32_0 : i32, i32
  }
  func.func @transform_4(%arg0: i32) -> (i32, i32) {
    %c0_i32 = arith.constant 0 : i32
    %c0_i32_0 = arith.constant 0 : i32
    return %arg0, %c0_i32 : i32, i32
  }
}

</mosaic_0001>

<llo_original>
// kernel: tpu_custom_call.1
$region0: #{tpu_custom_call.1}
  #allocation0 [shape = 'u32[]', space=smem, size = 0x4, offset = 0x4, fixed_abs, tag = 'smem constant byte address 0x4 - core index']
  #allocation1 [shape = 'u32[144,128]{1,0:T(1,128)}', space=vmem, size = 0x12000, scoped, tag = 'internal scratch']
  %s0 = inlined_call_operand.hbm [shape: f32[8,32], index: 0, kind: input, shape index: {}]
  %s1 = inlined_call_operand.hbm [shape: bf16[32,128], index: 1, kind: input, shape index: {}]
  %s2 = inlined_call_operand.hbm [shape: bf16[128,128], index: 2, kind: input, shape index: {}]
  %s3 = inlined_call_operand.hbm [shape: f32[8,128], index: 3, kind: input, shape index: {}]
  %s4 = inlined_call_operand.hbm [shape: f32[8,64], index: 4, kind: output, shape index: {}]
  %s5 = sld [smem:[#allocation0]]
  $region42: #{tpu_custom_call.1} parent=0
    _
  %s7 = ssub.s32 1, %s5
  %s8 = scalar_select 0, %s7, %s5
  $region1: #{tpu_custom_call.1} parent=0
    #allocation2 [shape = 'u8[4096]{0}', space=vmem, size = 0x1000, scoped, tag = 'input window, operand 0, single buffered']
    #allocation3 [shape = 's32[1]{0}', space=sflag, size = 0x4, scoped, tag = 'scoped memory for tpu_custom_call.1']
    #allocation4 [shape = 's32[1]{0}', space=sflag, size = 0x4, scoped, tag = 'scoped memory for tpu_custom_call.1']
    #allocation5 [shape = 'u8[8192]{0}', space=vmem, size = 0x2000, scoped, tag = 'input window, operand 1, single buffered']
    #allocation6 [shape = 's32[1]{0}', space=sflag, size = 0x4, scoped, tag = 'scoped memory for tpu_custom_call.1']
    #allocation7 [shape = 'u8[32768]{0}', space=vmem, size = 0x8000, scoped, tag = 'input window, operand 2, single buffered']
    #allocation8 [shape = 'u8[4096]{0}', space=vmem, size = 0x1000, scoped, tag = 'input window, operand 3, single buffered']
    #allocation9 [shape = 's32[1]{0}', space=sflag, size = 0x4, scoped, tag = 'scoped memory for tpu_custom_call.1']
    #allocation10 [shape = 'u8[4096]{0}', space=vmem, size = 0x1000, scoped, tag = 'output window, operand 0, single buffered']
    %9 = vsyncpa [#allocation3], 0
    %10 = vsyncpa [#allocation6], 0
    %11 = vsyncpa [#allocation9], 0
    %12 = vsyncpa [#allocation4], 0
    // Predicated region
    $region2: #{tpu_custom_call.1} parent=1 // pred_check
      _
    $region3: #{tpu_custom_call.1} parent=1 // pred_check_branch
      %14 = sbr.rel (0) target = $region5
    $region4: #{tpu_custom_call.1} parent=1 // pred_region
      %s16 = ssub.s32 128, 128
      %17 = vsyncadd [#allocation3], %s16
      %s19 = sshll.u32 [#allocation2], 4
      %s20 = int_to_ptr.vmem [resolvable:$true] %s19
      %22 = dma.hbm_to_vmem [thread:$0]  %s0, 128, %s20, [#allocation3]
    $region5: #{tpu_custom_call.1} parent=1 // pred_fallthru
      _
    // Predicated region
    $region6: #{tpu_custom_call.1} parent=1 // pred_check
      _
    $region7: #{tpu_custom_call.1} parent=1 // pred_check_branch
      %24 = sbr.rel (0) target = $region9
    $region8: #{tpu_custom_call.1} parent=1 // pred_region
      %s26 = ssub.s32 256, 256
      %27 = vsyncadd [#allocation6], %s26
      %s28 = sshll.u32 [#allocation5], 4
      %s29 = int_to_ptr.vmem [resolvable:$true] %s28
      %34 = dma.hbm_to_vmem [thread:$0]  %s1, 256, %s29, [#allocation6], 64, 64, 4
    $region9: #{tpu_custom_call.1} parent=1 // pred_fallthru
      _
    // Predicated region
    $region10: #{tpu_custom_call.1} parent=1 // pred_check
      _
    $region11: #{tpu_custom_call.1} parent=1 // pred_check_branch
      %36 = sbr.rel (0) target = $region13
    $region12: #{tpu_custom_call.1} parent=1 // pred_region
      %s38 = ssub.s32 1024, 1024
      %39 = vsyncadd [#allocation6], %s38
      %s40 = sshll.u32 [#allocation7], 4
      %s41 = int_to_ptr.vmem [resolvable:$true] %s40
      %46 = dma.hbm_to_vmem [thread:$0]  %s2, 1024, %s41, [#allocation6], 64, 64, 4
    $region13: #{tpu_custom_call.1} parent=1 // pred_fallthru
      _
    // Predicated region
    $region14: #{tpu_custom_call.1} parent=1 // pred_check
      _
    $region15: #{tpu_custom_call.1} parent=1 // pred_check_branch
      %48 = sbr.rel (0) target = $region17
    $region16: #{tpu_custom_call.1} parent=1 // pred_region
      %s50 = ssub.s32 128, 128
      %51 = vsyncadd [#allocation9], %s50
      %s53 = sshll.u32 [#allocation8], 4
      %s54 = int_to_ptr.vmem [resolvable:$true] %s53
      %56 = dma.hbm_to_vmem [thread:$0]  %s3, 128, %s54, [#allocation9]
    $region17: #{tpu_custom_call.1} parent=1 // pred_fallthru
      _
    // Predicated region
    $region18: #{tpu_custom_call.1} parent=1 // pred_check
      _
    $region19: #{tpu_custom_call.1} parent=1 // pred_check_branch
      %58 = sbr.rel (0) target = $region21
    $region20: #{tpu_custom_call.1} parent=1 // pred_region
      %59 = dma.done [#allocation3], 128
    $region21: #{tpu_custom_call.1} parent=1 // pred_fallthru
      _
    // Predicated region
    $region22: #{tpu_custom_call.1} parent=1 // pred_check
      _
    $region23: #{tpu_custom_call.1} parent=1 // pred_check_branch
      %61 = sbr.rel (0) target = $region25
    $region24: #{tpu_custom_call.1} parent=1 // pred_region
      %62 = dma.done [#allocation6], 256
    $region25: #{tpu_custom_call.1} parent=1 // pred_fallthru
      _
    // Predicated region
    $region26: #{tpu_custom_call.1} parent=1 // pred_check
      _
    $region27: #{tpu_custom_call.1} parent=1 // pred_check_branch
      %64 = sbr.rel (0) target = $region29
    $region28: #{tpu_custom_call.1} parent=1 // pred_region
      %65 = dma.done [#allocation6], 1024
    $region29: #{tpu_custom_call.1} parent=1 // pred_fallthru
      _
    // Predicated region
    $region30: #{tpu_custom_call.1} parent=1 // pred_check
      _
    $region31: #{tpu_custom_call.1} parent=1 // pred_check_branch
      %67 = sbr.rel (0) target = $region33
    $region32: #{tpu_custom_call.1} parent=1 // pred_region
      %68 = dma.done [#allocation9], 128
    $region33: #{tpu_custom_call.1} parent=1 // pred_fallthru
      _
    %v70 = vld [vmem:[#allocation8] sm:$0xff]
    %v71 = vld [vmem:[#allocation2] sm:$0xff]
    %v72 = vpack.c.bf16 %v71, %v71
    %v73 = vld [vmem:[#allocation5] sm:$0xf]
    %v74 = vld [vmem:[#allocation5 + $0x4] sm:$0xf]
    %v75 = vld [vmem:[#allocation5 + $0x8] sm:$0xf]
    %v76 = vld [vmem:[#allocation5 + $0xc] sm:$0xf]
    %v77 = vlaneseq
    %v78 = vshrl.u32 %v77, 7
    %v79 = vsub.s32 0, %v78
    %v80 = vrot.slane %v70, %v79
    %v85 = vunpack.c.l.b16 %v73
    %v86 = vunpack.c.l.b16 %v74
    %v87 = vunpack.c.l.b16 %v75
    %v88 = vunpack.c.l.b16 %v76
    %v89 = vpack.c.b16 %v86, %v85
    %v90 = vpack.c.b16 %v88, %v87
    %vm93 = vcmask 261120
    %v95 = vsel %vm93, %v72, 0
    %97 = vmatprep.subr.bf16.mxu0 0
    %98 = vmatpush1.bf16.msra.mxu0 0
    %99 = vmatprep.subr.bf16.mxu0 0
    %100 = vmatpush1.bf16.msra.mxu0 0
    %101 = vmatprep.subr.bf16.mxu0 0
    %102 = vmatpush1.bf16.msra.mxu0 0
    %103 = vmatprep.subr.bf16.mxu0 0
    %104 = vmatpush1.bf16.msra.mxu0 0
    %105 = vmatprep.subr.bf16.mxu0 0
    %106 = vmatpush1.bf16.msra.mxu0 0
    %107 = vmatprep.subr.bf16.mxu0 0
    %108 = vmatpush1.bf16.msra.mxu0 0
    %109 = vmatprep.subr.bf16.mxu0 0
    %110 = vmatpush1.bf16.msra.mxu0 %v90
    %111 = vmatprep.subr.bf16.mxu0 0
    %112 = vmatpush1.bf16.msra.mxu0 %v89
    %113 = vmatprep.subr.bf16.mxu0 0
    %114 = vmatpush2.bf16.msra.mxu0 0
    %115 = vmatprep.subr.bf16.mxu0 0
    %116 = vmatpush2.bf16.msra.mxu0 0
    %117 = vmatprep.subr.bf16.mxu0 0
    %118 = vmatpush2.bf16.msra.mxu0 0
    %119 = vmatprep.subr.bf16.mxu0 0
    %120 = vmatpush2.bf16.msra.mxu0 0
    %121 = vmatprep.subr.bf16.mxu0 0
    %122 = vmatpush2.bf16.msra.mxu0 0
    %123 = vmatprep.subr.bf16.mxu0 0
    %124 = vmatpush2.bf16.msra.mxu0 0
    %125 = vmatprep.subr.bf16.mxu0 0
    %126 = vmatpush2.bf16.msra.mxu0 0
    %127 = vmatprep.subr.bf16.mxu0 0
    %128 = vmatpush2.bf16.msra.mxu0 0
    %129 = vmatprep.mubr.bf16.mxu0 0
    %130 = vmatmul.mubr.bf16.gmra.mxu0 %v95
    %v131 = vpop.f32.mrf.mxu0
    %v132 = vadd.f32 %v80, %v131
    %v133 = vpop.f32.mrf.mxu0
    %v134 = vpop.f32.mrf.mxu0
    %v135 = vpop.f32.mrf.mxu0
    %136 = vdwg.mxu0
    %v137 = vlaneseq
    %v138 = vshrl.u32 %v137, 7
    %v139 = vsub.s32 1, %v138
    %v140 = vrot.slane %v70, %v139
    %v141 = vmul.f32 %v132, %v140
    %v142 = vlaneseq
    %v143 = vshrl.u32 %v142, 7
    %v144 = vsub.s32 2, %v143
    %v145 = vrot.slane %v70, %v144
    %v146 = vadd.f32 %v141, %v145
    %vm147 = vcmp.gt.f32.partialorder %v146, 0.0
    %v148 = vmul.f32 %v146, 0.01
    %v149 = vsel %vm147, %v146, %v148
    %v150 = vpack.c.bf16 %v149, %v149
    %v151 = vld [vmem:[#allocation7] sm:$0xf]
    %v152 = vld [vmem:[#allocation7 + $0x4] sm:$0xf]
    %v153 = vld [vmem:[#allocation7 + $0x8] sm:$0xf]
    %v154 = vld [vmem:[#allocation7 + $0xc] sm:$0xf]
    %v155 = vld [vmem:[#allocation7 + $0x10] sm:$0xf]
    %v156 = vld [vmem:[#allocation7 + $0x14] sm:$0xf]
    %v157 = vld [vmem:[#allocation7 + $0x18] sm:$0xf]
    %v158 = vld [vmem:[#allocation7 + $0x1c] sm:$0xf]
    %v159 = vld [vmem:[#allocation7 + $0x20] sm:$0xf]
    %v160 = vld [vmem:[#allocation7 + $0x24] sm:$0xf]
    %v161 = vld [vmem:[#allocation7 + $0x28] sm:$0xf]
    %v162 = vld [vmem:[#allocation7 + $0x2c] sm:$0xf]
    %v163 = vld [vmem:[#allocation7 + $0x30] sm:$0xf]
    %v164 = vld [vmem:[#allocation7 + $0x34] sm:$0xf]
    %v165 = vld [vmem:[#allocation7 + $0x38] sm:$0xf]
    %v166 = vld [vmem:[#allocation7 + $0x3c] sm:$0xf]
    %v167 = vlaneseq
    %v168 = vshrl.u32 %v167, 7
    %v169 = vsub.s32 3, %v168
    %v170 = vrot.slane %v70, %v169
    %v187 = vunpack.c.l.b16 %v151
    %v188 = vunpack.c.l.b16 %v152
    %v189 = vunpack.c.l.b16 %v153
    %v190 = vunpack.c.l.b16 %v154
    %v191 = vunpack.c.l.b16 %v155
    %v192 = vunpack.c.l.b16 %v156
    %v193 = vunpack.c.l.b16 %v157
    %v194 = vunpack.c.l.b16 %v158
    %v195 = vunpack.c.l.b16 %v159
    %v196 = vunpack.c.l.b16 %v160
    %v197 = vunpack.c.l.b16 %v161
    %v198 = vunpack.c.l.b16 %v162
    %v199 = vunpack.c.l.b16 %v163
    %v200 = vunpack.c.l.b16 %v164
    %v201 = vunpack.c.l.b16 %v165
    %v202 = vunpack.c.l.b16 %v166
    %v203 = vpack.c.b16 %v188, %v187
    %v204 = vpack.c.b16 %v190, %v189
    %v205 = vpack.c.b16 %v192, %v191
    %v206 = vpack.c.b16 %v194, %v193
    %v207 = vpack.c.b16 %v196, %v195
    %v208 = vpack.c.b16 %v198, %v197
    %v209 = vpack.c.b16 %v200, %v199
    %v210 = vpack.c.b16 %v202, %v201
    %219 = vmatprep.subr.bf16.mxu0 0
    %220 = vmatpush1.bf16.msra.mxu0 %v210
    %221 = vmatprep.subr.bf16.mxu0 0
    %222 = vmatpush1.bf16.msra.mxu0 %v209
    %223 = vmatprep.subr.bf16.mxu0 0
    %224 = vmatpush1.bf16.msra.mxu0 %v208
    %225 = vmatprep.subr.bf16.mxu0 0
    %226 = vmatpush1.bf16.msra.mxu0 %v207
    %227 = vmatprep.subr.bf16.mxu0 0
    %228 = vmatpush1.bf16.msra.mxu0 %v206
    %229 = vmatprep.subr.bf16.mxu0 0
    %230 = vmatpush1.bf16.msra.mxu0 %v205
    %231 = vmatprep.subr.bf16.mxu0 0
    %232 = vmatpush1.bf16.msra.mxu0 %v204
    %233 = vmatprep.subr.bf16.mxu0 0
    %234 = vmatpush1.bf16.msra.mxu0 %v203
    %235 = vmatprep.subr.bf16.mxu0 0
    %236 = vmatpush2.bf16.msra.mxu0 0
    %237 = vmatprep.subr.bf16.mxu0 0
    %238 = vmatpush2.bf16.msra.mxu0 0
    %239 = vmatprep.subr.bf16.mxu0 0
    %240 = vmatpush2.bf16.msra.mxu0 0
    %241 = vmatprep.subr.bf16.mxu0 0
    %242 = vmatpush2.bf16.msra.mxu0 0
    %243 = vmatprep.subr.bf16.mxu0 0
    %244 = vmatpush2.bf16.msra.mxu0 0
    %245 = vmatprep.subr.bf16.mxu0 0
    %246 = vmatpush2.bf16.msra.mxu0 0
    %247 = vmatprep.subr.bf16.mxu0 0
    %248 = vmatpush2.bf16.msra.mxu0 0
    %249 = vmatprep.subr.bf16.mxu0 0
    %250 = vmatpush2.bf16.msra.mxu0 0
    %251 = vmatprep.mubr.bf16.mxu0 0
    %252 = vmatmul.mubr.bf16.gmra.mxu0 %v150
    %v253 = vpop.f32.mrf.mxu0
    %v254 = vadd.f32 %v170, %v253
    %v255 = vpop.f32.mrf.mxu0
    %v256 = vpop.f32.mrf.mxu0
    %v257 = vpop.f32.mrf.mxu0
    %258 = vdwg.mxu0
    %vm259 = vcmp.gt.f32.partialorder %v254, 0.0
    %v260 = vmul.f32 %v254, 0.01
    %v261 = vsel %vm259, %v254, %v260
    %v262 = vadd.f32 %v261, %v132
    %v263 = vlaneseq
    %v264 = vshrl.u32 %v263, 7
    %v265 = vsub.s32 4, %v264
    %v266 = vrot.slane %v70, %v265
    %v267 = vmul.f32 %v262, %v266
    %v268 = vlaneseq
    %v269 = vshrl.u32 %v268, 7
    %v270 = vsub.s32 5, %v269
    %v271 = vrot.slane %v70, %v270
    %v272 = vadd.f32 %v267, %v271
    %vm273 = vcmask 523264
    %274 = vst.msk [vmem:[#allocation10] sm:$0xff] %vm273, %v272
    // Predicated region
    $region34: #{tpu_custom_call.1} parent=1 // pred_check
      _
    $region35: #{tpu_custom_call.1} parent=1 // pred_check_branch
      %276 = sbr.rel (0) target = $region37
    $region36: #{tpu_custom_call.1} parent=1 // pred_region
      %s278 = ssub.s32 128, 128
      %279 = vsyncadd [#allocation4], %s278
      %s281 = sshll.u32 [#allocation10], 4
      %s282 = int_to_ptr.vmem [resolvable:$true] %s281
      %284 = dma.vmem_to_hbm [thread:$0]  %s282, 128, %s4, [#allocation4]
    $region37: #{tpu_custom_call.1} parent=1 // pred_fallthru
      _
    // Predicated region
    $region38: #{tpu_custom_call.1} parent=1 // pred_check
      _
    $region39: #{tpu_custom_call.1} parent=1 // pred_check_branch
      %286 = sbr.rel (0) target = $region41
    $region40: #{tpu_custom_call.1} parent=1 // pred_region
      %287 = dma.done [#allocation4], 128
    $region41: #{tpu_custom_call.1} parent=1 // pred_fallthru
      _
    %288 = vsyncpa [#allocation3], 1
    %289 = vsyncpa [#allocation6], 1
    %290 = vsyncpa [#allocation9], 1
    %291 = vsyncpa [#allocation4], 1

</llo_original>
